<compile_context>
chip_gen: v7x
topology: tpu7x:2x2x1
jax: 0.10.0
libtpu: 0.0.40
codegen_flags: <defaults>
</compile_context>

<pallas_src>
import jax
import jax.numpy as jnp
from jax.experimental import pallas as pl
from jax.experimental.pallas import tpu as pltpu

IN_DIM = 3
HID_DIM = 512
OUT_DIM = 2
OUT_PAD = 8            # lane pad for the 2-wide output (full-array last dim)
NEG_BIG = -1e30        # "minus infinity" bias for padded logit columns


def _softmax_last(x):
    # numerically-stable softmax over the last axis (XLU reduce + EUP exp/rcp)
    m = jnp.max(x, axis=-1, keepdims=True)
    e = jnp.exp(x - m)
    s = jnp.sum(e, axis=-1, keepdims=True)
    return e * pl.reciprocal(s, approx=False)


def mlp_softmax_kernel(x_ref, w1_ref, b1_ref, w2p_ref, b2p_ref, o_ref):
    x = x_ref[...]                     # (tb, 3)
    w1 = w1_ref[...]                   # (3, 512)

    # K=3 contraction as three VPU broadcast-FMAs (MXU pass would be >97% pad).
    h = b1_ref[...]                    # (1, 512) -> broadcasts to (tb, 512)
    h = h + x[:, 0:1] * w1[0:1, :]
    h = h + x[:, 1:2] * w1[1:2, :]
    h = h + x[:, 2:3] * w1[2:3, :]

    h = _softmax_last(h)               # softmax over the 512 hidden features

    # (tb,512) @ (512,8) on the MXU. Padded columns of W2 are zero and carry a
    # -1e30 bias -> exp()==0, so softmax over the 8-wide row is exactly the
    # 2-way softmax in columns 0..1 and 0 elsewhere.
    y = jnp.dot(h, w2p_ref[...], preferred_element_type=jnp.float32) + b2p_ref[...]
    o_ref[...] = _softmax_last(y).astype(o_ref.dtype)   # (tb, 8) store


def prepare_params(w1, b1, w2, b2):
    """One-time parameter massaging (hoisted out of the forward path)."""
    b1_2d = b1.reshape(1, HID_DIM).astype(jnp.float32)
    w2p = jnp.zeros((HID_DIM, OUT_PAD), jnp.float32).at[:, :OUT_DIM].set(w2)
    b2p = jnp.full((1, OUT_PAD), NEG_BIG, jnp.float32).at[0, :OUT_DIM].set(b2)
    return (w1.astype(jnp.float32), b1_2d, w2p, b2p)


def _choose_tile(B):
    b8 = ((B + 7) // 8) * 8            # sublane-aligned batch
    if B <= 256:
        return b8                      # single grid step, minimal overhead
    # >=2 steps so v7x's two TensorCores both get work; cap the tile at 1024
    # rows so the (tb,512) f32 intermediates stay ~2 MB (<< scoped VMEM).
    half = ((b8 + 15) // 16) * 8       # ceil(b8/2) rounded up to multiple of 8
    return min(1024, half)


def mymodel_forward(x, params, *, tb=None):
    w1, b1_2d, w2p, b2p = params
    B = x.shape[0]
    if tb is None:
        tb = _choose_tile(B)
    tb = max(8, ((tb + 7) // 8) * 8)
    grid = pl.cdiv(B, tb)
    B_pad = grid * tb
    if B_pad != B:
        x = jnp.pad(x, ((0, B_pad - B), (0, 0)))   # zero rows, sliced off below

    flops = 2 * B_pad * IN_DIM * HID_DIM + 2 * B_pad * HID_DIM * OUT_PAD
    transcendentals = B_pad * (HID_DIM + OUT_PAD)
    bytes_accessed = 4 * (B_pad * IN_DIM + IN_DIM * HID_DIM + HID_DIM
                          + HID_DIM * OUT_PAD + OUT_PAD + B_pad * OUT_PAD)

    out_padded = pl.pallas_call(
        mlp_softmax_kernel,
        out_shape=jax.ShapeDtypeStruct((B_pad, OUT_PAD), jnp.float32),
        grid_spec=pltpu.PrefetchScalarGridSpec(
            num_scalar_prefetch=0,
            grid=(grid,),
            in_specs=[
                pl.BlockSpec((tb, IN_DIM), lambda i: (i, 0)),        # x tile
                pl.BlockSpec((IN_DIM, HID_DIM), lambda i: (0, 0)),   # W1 (resident)
                pl.BlockSpec((1, HID_DIM), lambda i: (0, 0)),        # b1
                pl.BlockSpec((HID_DIM, OUT_PAD), lambda i: (0, 0)),  # W2 padded
                pl.BlockSpec((1, OUT_PAD), lambda i: (0, 0)),        # b2 padded
            ],
            out_specs=pl.BlockSpec((tb, OUT_PAD), lambda i: (i, 0)),
        ),
        compiler_params=pltpu.CompilerParams(
            dimension_semantics=("parallel",),
            vmem_limit_bytes=32 * 1024 * 1024),
        cost_estimate=pl.CostEstimate(
            flops=flops,
            transcendentals=transcendentals,
            bytes_accessed=bytes_accessed),
    )(x, w1, b1_2d, w2p, b2p)

    return out_padded[:B, :OUT_DIM]


def _init_params(key):
    """Deterministic params mirroring nn.Linear(3,512) and nn.Linear(512,2)."""
    k1, k2, k3, k4 = jax.random.split(key, 4)
    # torch nn.Linear default init: U(-1/sqrt(fan_in), 1/sqrt(fan_in))
    lim1 = 1.0 / jnp.sqrt(IN_DIM)
    lim2 = 1.0 / jnp.sqrt(HID_DIM)
    w1 = jax.random.uniform(k1, (IN_DIM, HID_DIM), jnp.float32, -lim1, lim1)
    b1 = jax.random.uniform(k2, (HID_DIM,), jnp.float32, -lim1, lim1)
    w2 = jax.random.uniform(k3, (HID_DIM, OUT_DIM), jnp.float32, -lim2, lim2)
    b2 = jax.random.uniform(k4, (OUT_DIM,), jnp.float32, -lim2, lim2)
    return w1, b1, w2, b2


def _reference(x, w1, b1, w2, b2):
    h = jax.nn.softmax(x @ w1 + b1, axis=-1)
    return jax.nn.softmax(h @ w2 + b2, axis=-1)


if __name__ == "__main__":
    key = jax.random.PRNGKey(0)
    kx, kx2, kp = jax.random.split(key, 3)
    w1, b1, w2, b2 = _init_params(kp)
    params = prepare_params(w1, b1, w2, b2)   # one-time padding/reshape

    # Small batch (single grid step).
    B = 16
    x = jax.random.normal(kx, (B, IN_DIM), jnp.float32)
    out = jax.block_until_ready(mymodel_forward(x, params))
    ref = _reference(x, w1, b1, w2, b2)
    assert out.shape == (B, OUT_DIM)
    assert jnp.allclose(out, ref, atol=1e-5, rtol=1e-5)

    # Odd batch (exercises the zero-pad path instead of asserting out).
    B2 = 13
    x2 = jax.random.normal(kx2, (B2, IN_DIM), jnp.float32)
    out2 = jax.block_until_ready(mymodel_forward(x2, params))
    ref2 = _reference(x2, w1, b1, w2, b2)
    assert out2.shape == (B2, OUT_DIM)
    assert jnp.allclose(out2, ref2, atol=1e-5, rtol=1e-5)

    print("KERNEL_OK")
</pallas_src>

<mosaic_0001>
module attributes {stable_mosaic.version = 11 : i64} {
  func.func @mlp_softmax_kernel(%arg0: i32, %arg1: memref<16x3xf32, #tpu.memory_space<vmem>>, %arg2: memref<3x512xf32, #tpu.memory_space<vmem>>, %arg3: memref<1x512xf32, #tpu.memory_space<vmem>>, %arg4: memref<512x8xf32, #tpu.memory_space<vmem>>, %arg5: memref<1x8xf32, #tpu.memory_space<vmem>>, %arg6: memref<16x8xf32, #tpu.memory_space<vmem>>) attributes {dimension_semantics = [#tpu.dimension_semantics<parallel>], iteration_bounds = array<i64: 1>, scalar_prefetch = 0 : i64, scratch_operands = 0 : i64, tpu.core_type = #tpu.core_type<tc>, window_params = [{transform_indices = @transform_0, window_bounds = array<i64: 16, 3>}, {pipeline_mode = #tpu.pipeline_mode<synchronous>, transform_indices = @transform_1, window_bounds = array<i64: 3, 512>}, {pipeline_mode = #tpu.pipeline_mode<synchronous>, transform_indices = @transform_2, window_bounds = array<i64: 1, 512>}, {pipeline_mode = #tpu.pipeline_mode<synchronous>, transform_indices = @transform_3, window_bounds = array<i64: 512, 8>}, {pipeline_mode = #tpu.pipeline_mode<synchronous>, transform_indices = @transform_4, window_bounds = array<i64: 1, 8>}, {transform_indices = @transform_5, window_bounds = array<i64: 16, 8>}]} {
    %c0 = arith.constant 0 : index
    %c0_0 = arith.constant 0 : index
    %0 = vector.load %arg1[%c0, %c0_0] : memref<16x3xf32, #tpu.memory_space<vmem>>, vector<16x3xf32>
    %c0_1 = arith.constant 0 : index
    %c0_2 = arith.constant 0 : index
    %1 = vector.load %arg2[%c0_1, %c0_2] : memref<3x512xf32, #tpu.memory_space<vmem>>, vector<3x512xf32>
    %c0_3 = arith.constant 0 : index
    %c0_4 = arith.constant 0 : index
    %2 = vector.load %arg3[%c0_3, %c0_4] : memref<1x512xf32, #tpu.memory_space<vmem>>, vector<1x512xf32>
    %3 = vector.extract_strided_slice %0 {offsets = [0, 0], sizes = [16, 1], strides = [1, 1]} : vector<16x3xf32> to vector<16x1xf32>
    %4 = vector.extract_strided_slice %1 {offsets = [0, 0], sizes = [1, 512], strides = [1, 1]} : vector<3x512xf32> to vector<1x512xf32>
    %5 = vector.broadcast %3 : vector<16x1xf32> to vector<16x512xf32>
    %6 = vector.broadcast %4 : vector<1x512xf32> to vector<16x512xf32>
    %7 = arith.mulf %5, %6 : vector<16x512xf32>
    %8 = vector.broadcast %2 : vector<1x512xf32> to vector<16x512xf32>
    %9 = arith.addf %8, %7 : vector<16x512xf32>
    %10 = vector.extract_strided_slice %0 {offsets = [0, 1], sizes = [16, 1], strides = [1, 1]} : vector<16x3xf32> to vector<16x1xf32>
    %11 = vector.extract_strided_slice %1 {offsets = [1, 0], sizes = [1, 512], strides = [1, 1]} : vector<3x512xf32> to vector<1x512xf32>
    %12 = vector.broadcast %10 : vector<16x1xf32> to vector<16x512xf32>
    %13 = vector.broadcast %11 : vector<1x512xf32> to vector<16x512xf32>
    %14 = arith.mulf %12, %13 : vector<16x512xf32>
    %15 = arith.addf %9, %14 : vector<16x512xf32>
    %16 = vector.extract_strided_slice %0 {offsets = [0, 2], sizes = [16, 1], strides = [1, 1]} : vector<16x3xf32> to vector<16x1xf32>
    %17 = vector.extract_strided_slice %1 {offsets = [2, 0], sizes = [1, 512], strides = [1, 1]} : vector<3x512xf32> to vector<1x512xf32>
    %18 = vector.broadcast %16 : vector<16x1xf32> to vector<16x512xf32>
    %19 = vector.broadcast %17 : vector<1x512xf32> to vector<16x512xf32>
    %20 = arith.mulf %18, %19 : vector<16x512xf32>
    %21 = arith.addf %15, %20 : vector<16x512xf32>
    %cst = arith.constant dense<0xFF800000> : vector<16xf32>
    %22 = vector.multi_reduction <maximumf>, %21, %cst [1] : vector<16x512xf32> to vector<16xf32>
    %23 = vector.shape_cast %22 : vector<16xf32> to vector<16x1xf32>
    %24 = vector.broadcast %23 : vector<16x1xf32> to vector<16x512xf32>
    %25 = arith.subf %21, %24 : vector<16x512xf32>
    %26 = math.exp %25 : vector<16x512xf32>
    %cst_5 = arith.constant dense<0.000000e+00> : vector<16xf32>
    %27 = vector.multi_reduction <add>, %26, %cst_5 [1] : vector<16x512xf32> to vector<16xf32>
    %28 = vector.shape_cast %27 : vector<16xf32> to vector<16x1xf32>
    %29 = tpu.reciprocal %28 : vector<16x1xf32> -> vector<16x1xf32>
    %30 = vector.broadcast %29 : vector<16x1xf32> to vector<16x512xf32>
    %31 = arith.mulf %26, %30 : vector<16x512xf32>
    %c0_6 = arith.constant 0 : index
    %c0_7 = arith.constant 0 : index
    %32 = vector.load %arg4[%c0_6, %c0_7] : memref<512x8xf32, #tpu.memory_space<vmem>>, vector<512x8xf32>
    %cst_8 = arith.constant dense<0.000000e+00> : vector<16x8xf32>
    %33 = tpu.matmul %31, %32, %cst_8 {dimension_numbers = #tpu.dot_dimension_numbers<[1], [0], [0], [1], [0, 0, 1, 1], [], []>} : vector<16x512xf32>, vector<512x8xf32>, vector<16x8xf32> -> vector<16x8xf32>
    %c0_9 = arith.constant 0 : index
    %c0_10 = arith.constant 0 : index
    %34 = vector.load %arg5[%c0_9, %c0_10] : memref<1x8xf32, #tpu.memory_space<vmem>>, vector<1x8xf32>
    %35 = vector.broadcast %34 : vector<1x8xf32> to vector<16x8xf32>
    %36 = arith.addf %33, %35 : vector<16x8xf32>
    %cst_11 = arith.constant dense<0xFF800000> : vector<16xf32>
    %37 = vector.multi_reduction <maximumf>, %36, %cst_11 [1] : vector<16x8xf32> to vector<16xf32>
    %38 = vector.shape_cast %37 : vector<16xf32> to vector<16x1xf32>
    %39 = vector.broadcast %38 : vector<16x1xf32> to vector<16x8xf32>
    %40 = arith.subf %36, %39 : vector<16x8xf32>
    %41 = math.exp %40 : vector<16x8xf32>
    %cst_12 = arith.constant dense<0.000000e+00> : vector<16xf32>
    %42 = vector.multi_reduction <add>, %41, %cst_12 [1] : vector<16x8xf32> to vector<16xf32>
    %43 = vector.shape_cast %42 : vector<16xf32> to vector<16x1xf32>
    %44 = tpu.reciprocal %43 : vector<16x1xf32> -> vector<16x1xf32>
    %45 = vector.broadcast %44 : vector<16x1xf32> to vector<16x8xf32>
    %46 = arith.mulf %41, %45 : vector<16x8xf32>
    %c0_13 = arith.constant 0 : index
    %c0_14 = arith.constant 0 : index
    %47 = vector.load %arg6[%c0_13, %c0_14] : memref<16x8xf32, #tpu.memory_space<vmem>>, vector<16x8xf32>
    tpu.vector_store %arg6[%c0_13, %c0_14], %46 {strides = array<i32>} : memref<16x8xf32, #tpu.memory_space<vmem>>, vector<16x8xf32>,
    return
  }
  func.func @transform_0(%arg0: i32) -> (i32, i32) {
    %c0_i32 = arith.constant 0 : i32
    %c0_i32_0 = arith.constant 0 : i32
    return %arg0, %c0_i32 : i32, i32
  }
  func.func @transform_1(%arg0: i32) -> (i32, i32) {
    %c0_i32 = arith.constant 0 : i32
    %c0_i32_0 = arith.constant 0 : i32
    %c0_i32_1 = arith.constant 0 : i32
    return %c0_i32, %c0_i32_0 : i32, i32
  }
  func.func @transform_2(%arg0: i32) -> (i32, i32) {
    %c0_i32 = arith.constant 0 : i32
    %c0_i32_0 = arith.constant 0 : i32
    %c0_i32_1 = arith.constant 0 : i32
    return %c0_i32, %c0_i32_0 : i32, i32
  }
  func.func @transform_3(%arg0: i32) -> (i32, i32) {
    %c0_i32 = arith.constant 0 : i32
    %c0_i32_0 = arith.constant 0 : i32
    %c0_i32_1 = arith.constant 0 : i32
    return %c0_i32, %c0_i32_0 : i32, i32
  }
  func.func @transform_4(%arg0: i32) -> (i32, i32) {
    %c0_i32 = arith.constant 0 : i32
    %c0_i32_0 = arith.constant 0 : i32
    %c0_i32_1 = arith.constant 0 : i32
    return %c0_i32, %c0_i32_0 : i32, i32
  }
  func.func @transform_5(%arg0: i32) -> (i32, i32) {
    %c0_i32 = arith.constant 0 : i32
    %c0_i32_0 = arith.constant 0 : i32
    return %arg0, %c0_i32 : i32, i32
  }
}

</mosaic_0001>

<llo_original>
// kernel: tpu_custom_call.1
$region0: #{tpu_custom_call.1}
  #allocation0 [shape = 'u32[]', space=smem, size = 0x4, offset = 0x4, fixed_abs, tag = 'smem constant byte address 0x4 - core index']
  #allocation1 [shape = 'u32[144,128]{1,0:T(1,128)}', space=vmem, size = 0x12000, scoped, tag = 'internal scratch']
  %s0 = inlined_call_operand.vmem [shape: f32[16,3], index: 0, kind: input, shape index: {}]
  %s1 = inlined_call_operand.vmem [shape: f32[3,512], index: 1, kind: input, shape index: {}]
  %s2 = inlined_call_operand.vmem [shape: f32[1,512], index: 2, kind: input, shape index: {}]
  %s3 = inlined_call_operand.vmem [shape: f32[512,8], index: 3, kind: input, shape index: {}]
  %s4 = inlined_call_operand.vmem [shape: f32[1,8], index: 4, kind: input, shape index: {}]
  %s5 = inlined_call_operand.vmem [shape: f32[16,8], index: 5, kind: output, shape index: {}]
  %s6 = sld [smem:[#allocation0]]
  $region30: #{tpu_custom_call.1} parent=0
    _
  %s8 = ssub.s32 1, %s6
  %s9 = scalar_select 0, %s8, %s6
  // Predicated region
  $region2: #{tpu_custom_call.1} parent=0 // pred_check
    _
  $region3: #{tpu_custom_call.1} parent=0 // pred_check_branch
    %11 = sbr.rel (0) target = $region5
  $region4: #{tpu_custom_call.1} parent=0 // pred_region
    _
  $region5: #{tpu_custom_call.1} parent=0 // pred_fallthru
    _
  // Predicated region
  $region6: #{tpu_custom_call.1} parent=0 // pred_check
    _
  $region7: #{tpu_custom_call.1} parent=0 // pred_check_branch
    %13 = sbr.rel (0) target = $region9
  $region8: #{tpu_custom_call.1} parent=0 // pred_region
    _
  $region9: #{tpu_custom_call.1} parent=0 // pred_fallthru
    _
  // Predicated region
  $region10: #{tpu_custom_call.1} parent=0 // pred_check
    _
  $region11: #{tpu_custom_call.1} parent=0 // pred_check_branch
    %15 = sbr.rel (0) target = $region13
  $region12: #{tpu_custom_call.1} parent=0 // pred_region
    _
  $region13: #{tpu_custom_call.1} parent=0 // pred_fallthru
    _
  // Predicated region
  $region14: #{tpu_custom_call.1} parent=0 // pred_check
    _
  $region15: #{tpu_custom_call.1} parent=0 // pred_check_branch
    %17 = sbr.rel (0) target = $region17
  $region16: #{tpu_custom_call.1} parent=0 // pred_region
    _
  $region17: #{tpu_custom_call.1} parent=0 // pred_fallthru
    _
  // Predicated region
  $region18: #{tpu_custom_call.1} parent=0 // pred_check
    _
  $region19: #{tpu_custom_call.1} parent=0 // pred_check_branch
    %19 = sbr.rel (0) target = $region21
  $region20: #{tpu_custom_call.1} parent=0 // pred_region
    _
  $region21: #{tpu_custom_call.1} parent=0 // pred_fallthru
    _
  %v20 = vld [vmem:[%s0] sm:$0xff]
  %v21 = vld [vmem:[%s0 + $0x8] sm:$0xff]
  %v22 = vld [vmem:[%s1] sm:$0x77]
  %v23 = vld [vmem:[%s1 + $0x8] sm:$0x77]
  %v24 = vld [vmem:[%s2] sm:$0xf]
  %26 = vset.pattern.permute.xlu0 0
  %27 = vperm.xlu0 %26, %v20
  %v28 = vpop.permute.xlu0 %27
  %31 = vset.pattern.permute.xlu0 0
  %32 = vperm.xlu0 %31, %v21
  %v33 = vpop.permute.xlu0 %32
  %v37 = vlaneseq
  %v38 = vshrl.u32 %v37, 7
  %v39 = vsub.s32 0, %v38
  %v40 = vrot.slane %v22, %v39
  %v41 = vlaneseq
  %v42 = vshrl.u32 %v41, 7
  %v43 = vsub.s32 4, %v42
  %v44 = vrot.slane %v22, %v43
  %v45 = vlaneseq
  %v46 = vshrl.u32 %v45, 7
  %v47 = vsub.s32 0, %v46
  %v48 = vrot.slane %v23, %v47
  %v49 = vlaneseq
  %v50 = vshrl.u32 %v49, 7
  %v51 = vsub.s32 4, %v50
  %v52 = vrot.slane %v23, %v51
  %v57 = vlaneseq
  %v58 = vshrl.u32 %v57, 7
  %v59 = vsub.s32 0, %v58
  %v60 = vrot.slane %v40, %v59
  %v61 = vlaneseq
  %v62 = vshrl.u32 %v61, 7
  %v63 = vsub.s32 0, %v62
  %v64 = vrot.slane %v44, %v63
  %v65 = vlaneseq
  %v66 = vshrl.u32 %v65, 7
  %v67 = vsub.s32 0, %v66
  %v68 = vrot.slane %v48, %v67
  %v69 = vlaneseq
  %v70 = vshrl.u32 %v69, 7
  %v71 = vsub.s32 0, %v70
  %v72 = vrot.slane %v52, %v71
  %v73 = vmul.f32 %v28, %v60
  %v74 = vmul.f32 %v28, %v64
  %v75 = vmul.f32 %v28, %v68
  %v76 = vmul.f32 %v28, %v72
  %v77 = vmul.f32 %v33, %v60
  %v78 = vmul.f32 %v33, %v64
  %v79 = vmul.f32 %v33, %v68
  %v80 = vmul.f32 %v33, %v72
  %v82 = vlaneseq
  %v83 = vshrl.u32 %v82, 7
  %v84 = vsub.s32 0, %v83
  %v85 = vrot.slane %v24, %v84
  %v86 = vlaneseq
  %v87 = vshrl.u32 %v86, 7
  %v88 = vsub.s32 1, %v87
  %v89 = vrot.slane %v24, %v88
  %v90 = vlaneseq
  %v91 = vshrl.u32 %v90, 7
  %v92 = vsub.s32 2, %v91
  %v93 = vrot.slane %v24, %v92
  %v94 = vlaneseq
  %v95 = vshrl.u32 %v94, 7
  %v96 = vsub.s32 3, %v95
  %v97 = vrot.slane %v24, %v96
  %v102 = vadd.f32 %v85, %v73
  %v103 = vadd.f32 %v89, %v74
  %v104 = vadd.f32 %v93, %v75
  %v105 = vadd.f32 %v97, %v76
  %v106 = vadd.f32 %v85, %v77
  %v107 = vadd.f32 %v89, %v78
  %v108 = vadd.f32 %v93, %v79
  %v109 = vadd.f32 %v97, %v80
  %110 = vset.pattern.permute.xlu0 1
  %111 = vperm.xlu0 %110, %v20
  %v112 = vpop.permute.xlu0 %111
  %114 = vset.pattern.permute.xlu0 1
  %115 = vperm.xlu0 %114, %v21
  %v116 = vpop.permute.xlu0 %115
  %v118 = vlaneseq
  %v119 = vshrl.u32 %v118, 7
  %v120 = vsub.s32 1, %v119
  %v121 = vrot.slane %v22, %v120
  %v122 = vlaneseq
  %v123 = vshrl.u32 %v122, 7
  %v124 = vsub.s32 5, %v123
  %v125 = vrot.slane %v22, %v124
  %v126 = vlaneseq
  %v127 = vshrl.u32 %v126, 7
  %v128 = vsub.s32 1, %v127
  %v129 = vrot.slane %v23, %v128
  %v130 = vlaneseq
  %v131 = vshrl.u32 %v130, 7
  %v132 = vsub.s32 5, %v131
  %v133 = vrot.slane %v23, %v132
  %v138 = vlaneseq
  %v139 = vshrl.u32 %v138, 7
  %v140 = vsub.s32 1, %v139
  %v141 = vrot.slane %v121, %v140
  %v142 = vlaneseq
  %v143 = vshrl.u32 %v142, 7
  %v144 = vsub.s32 1, %v143
  %v145 = vrot.slane %v125, %v144
  %v146 = vlaneseq
  %v147 = vshrl.u32 %v146, 7
  %v148 = vsub.s32 1, %v147
  %v149 = vrot.slane %v129, %v148
  %v150 = vlaneseq
  %v151 = vshrl.u32 %v150, 7
  %v152 = vsub.s32 1, %v151
  %v153 = vrot.slane %v133, %v152
  %v154 = vmul.f32 %v112, %v141
  %v155 = vmul.f32 %v112, %v145
  %v156 = vmul.f32 %v112, %v149
  %v157 = vmul.f32 %v112, %v153
  %v158 = vmul.f32 %v116, %v141
  %v159 = vmul.f32 %v116, %v145
  %v160 = vmul.f32 %v116, %v149
  %v161 = vmul.f32 %v116, %v153
  %v162 = vadd.f32 %v102, %v154
  %v163 = vadd.f32 %v103, %v155
  %v164 = vadd.f32 %v104, %v156
  %v165 = vadd.f32 %v105, %v157
  %v166 = vadd.f32 %v106, %v158
  %v167 = vadd.f32 %v107, %v159
  %v168 = vadd.f32 %v108, %v160
  %v169 = vadd.f32 %v109, %v161
  %170 = vset.pattern.permute.xlu0 2
  %171 = vperm.xlu0 %170, %v20
  %v172 = vpop.permute.xlu0 %171
  %174 = vset.pattern.permute.xlu0 2
  %175 = vperm.xlu0 %174, %v21
  %v176 = vpop.permute.xlu0 %175
  %v178 = vlaneseq
  %v179 = vshrl.u32 %v178, 7
  %v180 = vsub.s32 2, %v179
  %v181 = vrot.slane %v22, %v180
  %v182 = vlaneseq
  %v183 = vshrl.u32 %v182, 7
  %v184 = vsub.s32 6, %v183
  %v185 = vrot.slane %v22, %v184
  %v186 = vlaneseq
  %v187 = vshrl.u32 %v186, 7
  %v188 = vsub.s32 2, %v187
  %v189 = vrot.slane %v23, %v188
  %v190 = vlaneseq
  %v191 = vshrl.u32 %v190, 7
  %v192 = vsub.s32 6, %v191
  %v193 = vrot.slane %v23, %v192
  %v198 = vlaneseq
  %v199 = vshrl.u32 %v198, 7
  %v200 = vsub.s32 2, %v199
  %v201 = vrot.slane %v181, %v200
  %v202 = vlaneseq
  %v203 = vshrl.u32 %v202, 7
  %v204 = vsub.s32 2, %v203
  %v205 = vrot.slane %v185, %v204
  %v206 = vlaneseq
  %v207 = vshrl.u32 %v206, 7
  %v208 = vsub.s32 2, %v207
  %v209 = vrot.slane %v189, %v208
  %v210 = vlaneseq
  %v211 = vshrl.u32 %v210, 7
  %v212 = vsub.s32 2, %v211
  %v213 = vrot.slane %v193, %v212
  %v214 = vmul.f32 %v172, %v201
  %v215 = vmul.f32 %v172, %v205
  %v216 = vmul.f32 %v172, %v209
  %v217 = vmul.f32 %v172, %v213
  %v218 = vmul.f32 %v176, %v201
  %v219 = vmul.f32 %v176, %v205
  %v220 = vmul.f32 %v176, %v209
  %v221 = vmul.f32 %v176, %v213
  %v222 = vadd.f32 %v162, %v214
  %v223 = vadd.f32 %v163, %v215
  %v224 = vadd.f32 %v164, %v216
  %v225 = vadd.f32 %v165, %v217
  %v226 = vadd.f32 %v166, %v218
  %v227 = vadd.f32 %v167, %v219
  %v228 = vadd.f32 %v168, %v220
  %v229 = vadd.f32 %v169, %v221
  %v230 = vmax.f32 %v222, %v224
  %v231 = vmax.f32 %v223, %v225
  %v232 = vmax.f32 %v230, %v231
  %233 = vmax.xlane.f32.xlu0 %v232
  %v234 = vpop.xlane.xlu0 %233
  %v235 = vmax.f32 %v226, %v228
  %v236 = vmax.f32 %v227, %v229
  %v237 = vmax.f32 %v235, %v236
  %238 = vmax.xlane.f32.xlu0 %v237
  %v239 = vpop.xlane.xlu0 %238
  %v240 = vsub.f32 %v222, %v234
  %v241 = vsub.f32 %v223, %v234
  %v242 = vsub.f32 %v224, %v234
  %v243 = vsub.f32 %v225, %v234
  %v244 = vsub.f32 %v226, %v239
  %v245 = vsub.f32 %v227, %v239
  %v246 = vsub.f32 %v228, %v239
  %v247 = vsub.f32 %v229, %v239
  %v248 = vmul.f32 %v240, 1.442695
  %v249 = vpow.pop %v248
  %v250 = vmul.f32 %v241, 1.442695
  %v251 = vpow.pop %v250
  %v252 = vmul.f32 %v242, 1.442695
  %v253 = vpow.pop %v252
  %v254 = vmul.f32 %v243, 1.442695
  %v255 = vpow.pop %v254
  %v256 = vmul.f32 %v244, 1.442695
  %v257 = vpow.pop %v256
  %v258 = vmul.f32 %v245, 1.442695
  %v259 = vpow.pop %v258
  %v260 = vmul.f32 %v246, 1.442695
  %v261 = vpow.pop %v260
  %v262 = vmul.f32 %v247, 1.442695
  %v263 = vpow.pop %v262
  %v264 = vadd.f32 %v249, %v251
  %v265 = vadd.f32 %v264, %v253
  %v266 = vadd.f32 %v265, %v255
  %267 = vadd.xlane.f32.xlu0 %v266
  %v268 = vpop.xlane.xlu0 %267
  %v269 = vadd.f32 %v257, %v259
  %v270 = vadd.f32 %v269, %v261
  %v271 = vadd.f32 %v270, %v263
  %272 = vadd.xlane.f32.xlu0 %v271
  %v273 = vpop.xlane.xlu0 %272
  %v274 = vrcp.pop %v268
  %v275 = vrcp.pop %v273
  %v276 = vmul.f32 %v249, %v274
  %v277 = vmul.f32 %v251, %v274
  %v278 = vmul.f32 %v253, %v274
  %v279 = vmul.f32 %v255, %v274
  %v280 = vmul.f32 %v257, %v275
  %v281 = vmul.f32 %v259, %v275
  %v282 = vmul.f32 %v261, %v275
  %v283 = vmul.f32 %v263, %v275
  %v284 = vld [vmem:[%s3] sm:$0xff]
  %v285 = vld [vmem:[%s3 + $0x8] sm:$0xff]
  %v286 = vld [vmem:[%s3 + $0x10] sm:$0xff]
  %v287 = vld [vmem:[%s3 + $0x18] sm:$0xff]
  %v288 = vld [vmem:[%s3 + $0x20] sm:$0xff]
  %v289 = vld [vmem:[%s3 + $0x28] sm:$0xff]
  %v290 = vld [vmem:[%s3 + $0x30] sm:$0xff]
  %v291 = vld [vmem:[%s3 + $0x38] sm:$0xff]
  %v292 = vld [vmem:[%s3 + $0x40] sm:$0xff]
  %v293 = vld [vmem:[%s3 + $0x48] sm:$0xff]
  %v294 = vld [vmem:[%s3 + $0x50] sm:$0xff]
  %v295 = vld [vmem:[%s3 + $0x58] sm:$0xff]
  %v296 = vld [vmem:[%s3 + $0x60] sm:$0xff]
  %v297 = vld [vmem:[%s3 + $0x68] sm:$0xff]
  %v298 = vld [vmem:[%s3 + $0x70] sm:$0xff]
  %v299 = vld [vmem:[%s3 + $0x78] sm:$0xff]
  %v300 = vld [vmem:[%s3 + $0x80] sm:$0xff]
  %v301 = vld [vmem:[%s3 + $0x88] sm:$0xff]
  %v302 = vld [vmem:[%s3 + $0x90] sm:$0xff]
  %v303 = vld [vmem:[%s3 + $0x98] sm:$0xff]
  %v304 = vld [vmem:[%s3 + $0xa0] sm:$0xff]
  %v305 = vld [vmem:[%s3 + $0xa8] sm:$0xff]
  %v306 = vld [vmem:[%s3 + $0xb0] sm:$0xff]
  %v307 = vld [vmem:[%s3 + $0xb8] sm:$0xff]
  %v308 = vld [vmem:[%s3 + $0xc0] sm:$0xff]
  %v309 = vld [vmem:[%s3 + $0xc8] sm:$0xff]
  %v310 = vld [vmem:[%s3 + $0xd0] sm:$0xff]
  %v311 = vld [vmem:[%s3 + $0xd8] sm:$0xff]
  %v312 = vld [vmem:[%s3 + $0xe0] sm:$0xff]
  %v313 = vld [vmem:[%s3 + $0xe8] sm:$0xff]
  %v314 = vld [vmem:[%s3 + $0xf0] sm:$0xff]
  %v315 = vld [vmem:[%s3 + $0xf8] sm:$0xff]
  %v316 = vld [vmem:[%s3 + $0x100] sm:$0xff]
  %v317 = vld [vmem:[%s3 + $0x108] sm:$0xff]
  %v318 = vld [vmem:[%s3 + $0x110] sm:$0xff]
  %v319 = vld [vmem:[%s3 + $0x118] sm:$0xff]
  %v320 = vld [vmem:[%s3 + $0x120] sm:$0xff]
  %v321 = vld [vmem:[%s3 + $0x128] sm:$0xff]
  %v322 = vld [vmem:[%s3 + $0x130] sm:$0xff]
  %v323 = vld [vmem:[%s3 + $0x138] sm:$0xff]
  %v324 = vld [vmem:[%s3 + $0x140] sm:$0xff]
  %v325 = vld [vmem:[%s3 + $0x148] sm:$0xff]
  %v326 = vld [vmem:[%s3 + $0x150] sm:$0xff]
  %v327 = vld [vmem:[%s3 + $0x158] sm:$0xff]
  %v328 = vld [vmem:[%s3 + $0x160] sm:$0xff]
  %v329 = vld [vmem:[%s3 + $0x168] sm:$0xff]
  %v330 = vld [vmem:[%s3 + $0x170] sm:$0xff]
  %v331 = vld [vmem:[%s3 + $0x178] sm:$0xff]
  %v332 = vld [vmem:[%s3 + $0x180] sm:$0xff]
  %v333 = vld [vmem:[%s3 + $0x188] sm:$0xff]
  %v334 = vld [vmem:[%s3 + $0x190] sm:$0xff]
  %v335 = vld [vmem:[%s3 + $0x198] sm:$0xff]
  %v336 = vld [vmem:[%s3 + $0x1a0] sm:$0xff]
  %v337 = vld [vmem:[%s3 + $0x1a8] sm:$0xff]
  %v338 = vld [vmem:[%s3 + $0x1b0] sm:$0xff]
  %v339 = vld [vmem:[%s3 + $0x1b8] sm:$0xff]
  %v340 = vld [vmem:[%s3 + $0x1c0] sm:$0xff]
  %v341 = vld [vmem:[%s3 + $0x1c8] sm:$0xff]
  %v342 = vld [vmem:[%s3 + $0x1d0] sm:$0xff]
  %v343 = vld [vmem:[%s3 + $0x1d8] sm:$0xff]
  %v344 = vld [vmem:[%s3 + $0x1e0] sm:$0xff]
  %v345 = vld [vmem:[%s3 + $0x1e8] sm:$0xff]
  %v346 = vld [vmem:[%s3 + $0x1f0] sm:$0xff]
  %v347 = vld [vmem:[%s3 + $0x1f8] sm:$0xff]
  %v348 = vld [vmem:[%s4] sm:$0x1]
  %v350 = vlaneseq
  %v351 = vshrl.u32 %v350, 7
  %v352 = vsub.s32 0, %v351
  %v353 = vrot.slane %v348, %v352
  %355 = vmatprep.subr.mxu0 0.0
  %356 = vmatpush1.msra.mxu0 %v284
  %357 = vmatprep.subr.mxu0 0.0
  %358 = vmatpush1.msra.mxu0 %v285
  %359 = vmatprep.subr.mxu0 0.0
  %360 = vmatpush1.msra.mxu0 %v286
  %361 = vmatprep.subr.mxu0 0.0
  %362 = vmatpush1.msra.mxu0 %v287
  %363 = vmatprep.subr.mxu0 0.0
  %364 = vmatpush1.msra.mxu0 %v288
  %365 = vmatprep.subr.mxu0 0.0
  %366 = vmatpush1.msra.mxu0 %v289
  %367 = vmatprep.subr.mxu0 0.0
  %368 = vmatpush1.msra.mxu0 %v290
  %369 = vmatprep.subr.mxu0 0.0
  %370 = vmatpush1.msra.mxu0 %v291
  %371 = vmatprep.subr.mxu0 0.0
  %372 = vmatpush1.msra.mxu0 %v292
  %373 = vmatprep.subr.mxu0 0.0
  %374 = vmatpush1.msra.mxu0 %v293
  %375 = vmatprep.subr.mxu0 0.0
  %376 = vmatpush1.msra.mxu0 %v294
  %377 = vmatprep.subr.mxu0 0.0
  %378 = vmatpush1.msra.mxu0 %v295
  %379 = vmatprep.subr.mxu0 0.0
  %380 = vmatpush1.msra.mxu0 %v296
  %381 = vmatprep.subr.mxu0 0.0
  %382 = vmatpush1.msra.mxu0 %v297
  %383 = vmatprep.subr.mxu0 0.0
  %384 = vmatpush1.msra.mxu0 %v298
  %385 = vmatprep.subr.mxu0 0.0
  %386 = vmatpush1.msra.mxu0 %v299
  %387 = vmatprep.subr.mxu0 0.0
  %388 = vmatpush1.msra.mxu0 %v300
  %389 = vmatprep.subr.mxu0 0.0
  %390 = vmatpush1.msra.mxu0 %v301
  %391 = vmatprep.subr.mxu0 0.0
  %392 = vmatpush1.msra.mxu0 %v302
  %393 = vmatprep.subr.mxu0 0.0
  %394 = vmatpush1.msra.mxu0 %v303
  %395 = vmatprep.subr.mxu0 0.0
  %396 = vmatpush1.msra.mxu0 %v304
  %397 = vmatprep.subr.mxu0 0.0
  %398 = vmatpush1.msra.mxu0 %v305
  %399 = vmatprep.subr.mxu0 0.0
  %400 = vmatpush1.msra.mxu0 %v306
  %401 = vmatprep.subr.mxu0 0.0
  %402 = vmatpush1.msra.mxu0 %v307
  %403 = vmatprep.subr.mxu0 0.0
  %404 = vmatpush1.msra.mxu0 %v308
  %405 = vmatprep.subr.mxu0 0.0
  %406 = vmatpush1.msra.mxu0 %v309
  %407 = vmatprep.subr.mxu0 0.0
  %408 = vmatpush1.msra.mxu0 %v310
  %409 = vmatprep.subr.mxu0 0.0
  %410 = vmatpush1.msra.mxu0 %v311
  %411 = vmatprep.subr.mxu0 0.0
  %412 = vmatpush1.msra.mxu0 %v312
  %413 = vmatprep.subr.mxu0 0.0
  %414 = vmatpush1.msra.mxu0 %v313
  %415 = vmatprep.subr.mxu0 0.0
  %416 = vmatpush1.msra.mxu0 %v314
  %417 = vmatprep.subr.mxu0 0.0
  %418 = vmatpush1.msra.mxu0 %v315
  %419 = vmatprep.mubr.f32.mxu0 %v277
  %420 = vmatmul.mubr.f32.gmra.mrb[0].mxu0 %v276
  %v421 = vpop.f32.mrb[0].mxu0
  %v422 = vadd.f32 %v353, %v421
  %v423 = vpop.f32.mrb[0].mxu0
  %424 = vmatprep.mubr.f32.mxu0 %v281
  %425 = vmatmul.mubr.f32.gmra.mrb[0].mxu0 %v280
  %v426 = vpop.f32.mrb[0].mxu0
  %v427 = vadd.f32 %v353, %v426
  %v428 = vpop.f32.mrb[0].mxu0
  %429 = vdwg.mxu0
  %430 = vmatprep.subr.mxu0 0.0
  %431 = vmatpush1.msra.mxu0 %v316
  %432 = vmatprep.subr.mxu0 0.0
  %433 = vmatpush1.msra.mxu0 %v317
  %434 = vmatprep.subr.mxu0 0.0
  %435 = vmatpush1.msra.mxu0 %v318
  %436 = vmatprep.subr.mxu0 0.0
  %437 = vmatpush1.msra.mxu0 %v319
  %438 = vmatprep.subr.mxu0 0.0
  %439 = vmatpush1.msra.mxu0 %v320
  %440 = vmatprep.subr.mxu0 0.0
  %441 = vmatpush1.msra.mxu0 %v321
  %442 = vmatprep.subr.mxu0 0.0
  %443 = vmatpush1.msra.mxu0 %v322
  %444 = vmatprep.subr.mxu0 0.0
  %445 = vmatpush1.msra.mxu0 %v323
  %446 = vmatprep.subr.mxu0 0.0
  %447 = vmatpush1.msra.mxu0 %v324
  %448 = vmatprep.subr.mxu0 0.0
  %449 = vmatpush1.msra.mxu0 %v325
  %450 = vmatprep.subr.mxu0 0.0
  %451 = vmatpush1.msra.mxu0 %v326
  %452 = vmatprep.subr.mxu0 0.0
  %453 = vmatpush1.msra.mxu0 %v327
  %454 = vmatprep.subr.mxu0 0.0
  %455 = vmatpush1.msra.mxu0 %v328
  %456 = vmatprep.subr.mxu0 0.0
  %457 = vmatpush1.msra.mxu0 %v329
  %458 = vmatprep.subr.mxu0 0.0
  %459 = vmatpush1.msra.mxu0 %v330
  %460 = vmatprep.subr.mxu0 0.0
  %461 = vmatpush1.msra.mxu0 %v331
  %462 = vmatprep.subr.mxu0 0.0
  %463 = vmatpush1.msra.mxu0 %v332
  %464 = vmatprep.subr.mxu0 0.0
  %465 = vmatpush1.msra.mxu0 %v333
  %466 = vmatprep.subr.mxu0 0.0
  %467 = vmatpush1.msra.mxu0 %v334
  %468 = vmatprep.subr.mxu0 0.0
  %469 = vmatpush1.msra.mxu0 %v335
  %470 = vmatprep.subr.mxu0 0.0
  %471 = vmatpush1.msra.mxu0 %v336
  %472 = vmatprep.subr.mxu0 0.0
  %473 = vmatpush1.msra.mxu0 %v337
  %474 = vmatprep.subr.mxu0 0.0
  %475 = vmatpush1.msra.mxu0 %v338
  %476 = vmatprep.subr.mxu0 0.0
  %477 = vmatpush1.msra.mxu0 %v339
  %478 = vmatprep.subr.mxu0 0.0
  %479 = vmatpush1.msra.mxu0 %v340
  %480 = vmatprep.subr.mxu0 0.0
  %481 = vmatpush1.msra.mxu0 %v341
  %482 = vmatprep.subr.mxu0 0.0
  %483 = vmatpush1.msra.mxu0 %v342
  %484 = vmatprep.subr.mxu0 0.0
  %485 = vmatpush1.msra.mxu0 %v343
  %486 = vmatprep.subr.mxu0 0.0
  %487 = vmatpush1.msra.mxu0 %v344
  %488 = vmatprep.subr.mxu0 0.0
  %489 = vmatpush1.msra.mxu0 %v345
  %490 = vmatprep.subr.mxu0 0.0
  %491 = vmatpush1.msra.mxu0 %v346
  %492 = vmatprep.subr.mxu0 0.0
  %493 = vmatpush1.msra.mxu0 %v347
  %494 = vmatprep.mubr.f32.mxu0 %v279
  %495 = vmatmul.mubr.f32.gmra.mrb[0].mxu0 %v278
  %v496 = vpop.f32.mrb[0].mxu0
  %v497 = vadd.f32 %v422, %v496
  %v498 = vpop.f32.mrb[0].mxu0
  %499 = vmatprep.mubr.f32.mxu0 %v283
  %500 = vmatmul.mubr.f32.gmra.mrb[0].mxu0 %v282
  %v501 = vpop.f32.mrb[0].mxu0
  %v502 = vadd.f32 %v427, %v501
  %v503 = vpop.f32.mrb[0].mxu0
  %504 = vdwg.mxu0
  %vm505 = vcmask 64512
  %v506 = vsel %vm505, %v497, -inf
  %507 = vmax.xlane.f32.xlu0 %v506
  %v508 = vpop.xlane.xlu0 %507
  %v509 = vsel %vm505, %v502, -inf
  %510 = vmax.xlane.f32.xlu0 %v509
  %v511 = vpop.xlane.xlu0 %510
  %v512 = vsub.f32 %v497, %v508
  %v513 = vsub.f32 %v502, %v511
  %v514 = vmul.f32 %v512, 1.442695
  %v515 = vpow.pop %v514
  %v516 = vmul.f32 %v513, 1.442695
  %v517 = vpow.pop %v516
  %v518 = vsel %vm505, %v515, 0.0
  %519 = vadd.xlane.f32.xlu0 %v518
  %v520 = vpop.xlane.xlu0 %519
  %v521 = vsel %vm505, %v517, 0.0
  %522 = vadd.xlane.f32.xlu0 %v521
  %v523 = vpop.xlane.xlu0 %522
  %v524 = vrcp.pop %v520
  %v525 = vrcp.pop %v523
  %v526 = vmul.f32 %v515, %v524
  %v527 = vmul.f32 %v517, %v525
  %528 = vst.msk [vmem:[%s5] sm:$0xff] %vm505, %v526
  %529 = vst.msk [vmem:[%s5 + $0x8] sm:$0xff] %vm505, %v527
  // Predicated region
  $region22: #{tpu_custom_call.1} parent=0 // pred_check
    _
  $region23: #{tpu_custom_call.1} parent=0 // pred_check_branch
    %531 = sbr.rel (0) target = $region25
  $region24: #{tpu_custom_call.1} parent=0 // pred_region
    _
  $region25: #{tpu_custom_call.1} parent=0 // pred_fallthru
    _
  // Predicated region
  $region26: #{tpu_custom_call.1} parent=0 // pred_check
    _
  $region27: #{tpu_custom_call.1} parent=0 // pred_check_branch
    %533 = sbr.rel (0) target = $region29
  $region28: #{tpu_custom_call.1} parent=0 // pred_region
    _
  $region29: #{tpu_custom_call.1} parent=0 // pred_fallthru
    _

</llo_original>
